<compile_context>
chip_gen: v7x
topology: tpu7x:2x2x1
jax: 0.10.0
libtpu: 0.0.40
codegen_flags: <defaults>
</compile_context>

<pallas_src>
import jax
import jax.numpy as jnp
from jax.experimental import pallas as pl
from jax.experimental.pallas import tpu as pltpu


def affine_coupling_kernel(x_ref, w1_ref, b1_ref, w2_ref, b2_ref, w3_ref, b3_ref,
                           z_ref, ssum_ref):
    """One batch tile of the coupling layer.

    x_ref    : (TB, dim)      full input tile (f32)
    w1_ref   : (half, dim)    Linear(half -> dim) weight, pre-transposed
    w2_ref   : (dim, dim)     Linear(dim -> dim) weight, pre-transposed
    w3_ref   : (dim, 2*half)  Linear(dim -> 2*half) weight, pre-transposed (fused s|t)
    b*_ref   : (1, out)       biases, f32
    z_ref    : (TB, dim)      output: [x_low | x_high * exp(s) + t]
    ssum_ref : (TB, 1)        output: sum(s, axis=1)  (log-det increment)
    """
    half = w1_ref.shape[0]
    wdt = w1_ref.dtype                      # MXU operand dtype (bf16 or f32)

    x = x_ref[...]                          # (TB, dim) f32
    x_low, x_high = x[:, :half], x[:, half:]

    # 3-layer MLP: bf16/f32 MXU operands, f32 accumulation, f32 elementwise.
    h1 = jnp.dot(x_low.astype(wdt), w1_ref[...],
                 preferred_element_type=jnp.float32) + b1_ref[...]
    h1 = jnp.maximum(h1, 0.0)
    h2 = jnp.dot(h1.astype(wdt), w2_ref[...],
                 preferred_element_type=jnp.float32) + b2_ref[...]
    h2 = jnp.maximum(h2, 0.0)
    nn_out = jnp.dot(h2.astype(wdt), w3_ref[...],
                     preferred_element_type=jnp.float32) + b3_ref[...]

    s = jnp.tanh(nn_out[:, :half])          # (TB, half) f32
    t = nn_out[:, half:]

    z_high = x_high * jnp.exp(s) + t
    # Single lane-dense (TB, dim) store; identity half is a pure pass-through.
    z_ref[...] = jnp.concatenate([x_low, z_high], axis=1).astype(z_ref.dtype)
    ssum_ref[...] = jnp.sum(s, axis=1, keepdims=True)


def affine_coupling_forward(x, log_det, params, *, tile_b=512,
                            weights_dtype=jnp.bfloat16,
                            single_buffer_weights=True):
    """x: (B, dim) f32, log_det: (B,) f32. Returns (z, log_det_out)."""
    B, dim = x.shape
    half = dim // 2
    assert 2 * half == dim, "dim must be even"

    # Weights pre-transposed to (in, out); MXU operands in weights_dtype, biases f32.
    w1 = params["w1"].astype(weights_dtype)                       # (half, dim)
    w2 = params["w2"].astype(weights_dtype)                       # (dim, dim)
    w3 = params["w3"].astype(weights_dtype)                       # (dim, 2*half)
    b1 = params["b1"].reshape(1, -1).astype(jnp.float32)          # (1, dim)
    b2 = params["b2"].reshape(1, -1).astype(jnp.float32)          # (1, dim)
    b3 = params["b3"].reshape(1, -1).astype(jnp.float32)          # (1, 2*half)
    weights = (w1, b1, w2, b2, w3, b3)

    # Batch tile: keep >= 2 grid steps when the batch is big enough so the
    # "parallel" axis can shard across v7x's two TensorCores; sublane-align.
    tb = min(tile_b, B)
    if tb == B and B >= 16:
        tb = ((-(-B // 2)) + 7) // 8 * 8
    nb = pl.cdiv(B, tb)

    # Explicit VMEM budget: double-buffered activation tiles + single (or
    # double) resident weights + compute intermediates + headroom.
    w_bytes = sum(int(a.size) * a.dtype.itemsize for a in weights)
    w_bufs = 1 if single_buffer_weights else 2
    act_bytes = tb * dim * 4                        # x tile (f32)
    out_bytes = tb * dim * 4 + tb * 128 * 4         # z tile + lane-padded ssum tile
    interm_bytes = 4 * tb * dim * 4                 # h1 / h2 / nn_out / temps (f32)
    vmem_limit = (2 * (act_bytes + out_bytes) + w_bufs * w_bytes
                  + interm_bytes + (8 << 20))
    vmem_limit = int(min(max(vmem_limit, 32 << 20), 120 << 20))

    act_in_spec = pl.BlockSpec((tb, dim), lambda i: (i, 0))
    z_spec = pl.BlockSpec((tb, dim), lambda i: (i, 0))
    ssum_spec = pl.BlockSpec((tb, 1), lambda i: (i, 0))

    def weight_spec(a, single_buffer):
        if single_buffer:
            # Constant-index resident block: one VMEM copy, no double buffering.
            return pl.BlockSpec(a.shape, lambda i: (0, 0),
                                pipeline_mode=pl.Buffered(1))
        return pl.BlockSpec(a.shape, lambda i: (0, 0))

    def run(single_buffer):
        return pl.pallas_call(
            affine_coupling_kernel,
            out_shape=(jax.ShapeDtypeStruct((B, dim), x.dtype),
                       jax.ShapeDtypeStruct((B, 1), jnp.float32)),
            grid_spec=pl.GridSpec(
                grid=(nb,),
                in_specs=[act_in_spec] + [weight_spec(a, single_buffer)
                                          for a in weights],
                out_specs=(z_spec, ssum_spec),
            ),
            compiler_params=pltpu.CompilerParams(
                dimension_semantics=("parallel",),
                vmem_limit_bytes=vmem_limit),
        )(x, *weights)

    if single_buffer_weights:
        try:
            z, ssum = run(True)
        except Exception:  # fall back if this JAX build rejects Buffered(1)
            z, ssum = run(False)
    else:
        z, ssum = run(False)

    return z, log_det + ssum[:, 0]


def init_params(key, dim):
    """Deterministic synthetic parameters (PyTorch Linear shapes, pre-transposed)."""
    half = dim // 2
    ks = jax.random.split(key, 6)
    scale = 0.1
    return {
        # nn.Linear(half, dim): weight (dim, half) -> stored transposed (half, dim)
        "w1": scale * jax.random.normal(ks[0], (half, dim), jnp.float32),
        "b1": scale * jax.random.normal(ks[1], (1, dim), jnp.float32),
        # nn.Linear(dim, dim)
        "w2": scale * jax.random.normal(ks[2], (dim, dim), jnp.float32),
        "b2": scale * jax.random.normal(ks[3], (1, dim), jnp.float32),
        # nn.Linear(dim, 2*half)
        "w3": scale * jax.random.normal(ks[4], (dim, 2 * half), jnp.float32),
        "b3": scale * jax.random.normal(ks[5], (1, 2 * half), jnp.float32),
    }


def reference_forward(x, log_det, params):
    """Pure-JAX reference mirroring the PyTorch module."""
    dim = x.shape[1]
    half = dim // 2
    x_half = x[:, :half]
    h1 = jax.nn.relu(x_half @ params["w1"] + params["b1"])
    h2 = jax.nn.relu(h1 @ params["w2"] + params["b2"])
    nn_out = h2 @ params["w3"] + params["b3"]
    s = jnp.tanh(nn_out[:, :half])
    t = nn_out[:, half:]
    z = jnp.concatenate([x[:, :half], x[:, half:] * jnp.exp(s) + t], axis=1)
    return z, log_det + jnp.sum(s, axis=1)


if __name__ == "__main__":
    key = jax.random.PRNGKey(0)
    k_x, k_ld, k_p, k_x2, k_ld2 = jax.random.split(key, 5)

    # Case 1: small shape matching the module spirit (dim even; half = 16).
    B, dim = 2, 32
    x = jax.random.normal(k_x, (B, dim), jnp.float32)
    log_det = jax.random.normal(k_ld, (B,), jnp.float32)
    params = init_params(k_p, dim)
    z_ref, ld_ref = reference_forward(x, log_det, params)

    # Exact-semantics check with f32 MXU operands (tight tolerance).
    z32, ld32 = affine_coupling_forward(x, log_det, params,
                                        weights_dtype=jnp.float32)
    jax.block_until_ready((z32, ld32))
    assert jnp.allclose(z32, z_ref, atol=1e-5, rtol=1e-5)
    assert jnp.allclose(ld32, ld_ref, atol=1e-5, rtol=1e-5)

    # Default fast path: bf16 MXU operands, f32 accumulation/elementwise.
    z, ld_out = affine_coupling_forward(x, log_det, params)
    jax.block_until_ready((z, ld_out))
    assert jnp.allclose(z, z_ref, atol=5e-2, rtol=5e-2)
    assert jnp.allclose(ld_out, ld_ref, atol=5e-2, rtol=5e-2)

    # Case 2: multi-tile grid + non-divisible batch (Pallas boundary masking,
    # no jnp.pad / slicing / concat in the wrapper).
    B2 = 300
    x2 = jax.random.normal(k_x2, (B2, dim), jnp.float32)
    ld2 = jax.random.normal(k_ld2, (B2,), jnp.float32)
    z2, ld2_out = affine_coupling_forward(x2, ld2, params, tile_b=128)
    jax.block_until_ready((z2, ld2_out))
    z2_ref, ld2_ref = reference_forward(x2, ld2, params)
    assert jnp.allclose(z2, z2_ref, atol=5e-2, rtol=5e-2)
    assert jnp.allclose(ld2_out, ld2_ref, atol=5e-2, rtol=5e-2)

    print("KERNEL_OK")
</pallas_src>

<mosaic_0001>
module attributes {stable_mosaic.version = 11 : i64} {
  func.func @affine_coupling_kernel(%arg0: i32, %arg1: memref<2x32xf32, #tpu.memory_space<vmem>>, %arg2: memref<16x32xf32, #tpu.memory_space<vmem>>, %arg3: memref<1x32xf32, #tpu.memory_space<vmem>>, %arg4: memref<32x32xf32, #tpu.memory_space<vmem>>, %arg5: memref<1x32xf32, #tpu.memory_space<vmem>>, %arg6: memref<32x32xf32, #tpu.memory_space<vmem>>, %arg7: memref<1x32xf32, #tpu.memory_space<vmem>>, %arg8: memref<2x32xf32, #tpu.memory_space<vmem>>, %arg9: memref<2x1xf32, #tpu.memory_space<vmem>>) attributes {dimension_semantics = [#tpu.dimension_semantics<parallel>], iteration_bounds = array<i64: 1>, scalar_prefetch = 0 : i64, scratch_operands = 0 : i64, tpu.core_type = #tpu.core_type<tc>, window_params = [{transform_indices = @transform_0, window_bounds = array<i64: 2, 32>}, {pipeline_mode = #tpu.pipeline_mode<synchronous>, transform_indices = @transform_1, window_bounds = array<i64: 16, 32>}, {pipeline_mode = #tpu.pipeline_mode<synchronous>, transform_indices = @transform_2, window_bounds = array<i64: 1, 32>}, {pipeline_mode = #tpu.pipeline_mode<synchronous>, transform_indices = @transform_3, window_bounds = array<i64: 32, 32>}, {pipeline_mode = #tpu.pipeline_mode<synchronous>, transform_indices = @transform_4, window_bounds = array<i64: 1, 32>}, {pipeline_mode = #tpu.pipeline_mode<synchronous>, transform_indices = @transform_5, window_bounds = array<i64: 32, 32>}, {pipeline_mode = #tpu.pipeline_mode<synchronous>, transform_indices = @transform_6, window_bounds = array<i64: 1, 32>}, {transform_indices = @transform_7, window_bounds = array<i64: 2, 32>}, {transform_indices = @transform_8, window_bounds = array<i64: 2, 1>}]} {
    %c0 = arith.constant 0 : index
    %c0_0 = arith.constant 0 : index
    %0 = vector.load %arg1[%c0, %c0_0] : memref<2x32xf32, #tpu.memory_space<vmem>>, vector<2x32xf32>
    %1 = vector.extract_strided_slice %0 {offsets = [0, 0], sizes = [2, 16], strides = [1, 1]} : vector<2x32xf32> to vector<2x16xf32>
    %2 = vector.extract_strided_slice %0 {offsets = [0, 16], sizes = [2, 16], strides = [1, 1]} : vector<2x32xf32> to vector<2x16xf32>
    %c0_1 = arith.constant 0 : index
    %c0_2 = arith.constant 0 : index
    %3 = vector.load %arg2[%c0_1, %c0_2] : memref<16x32xf32, #tpu.memory_space<vmem>>, vector<16x32xf32>
    %cst = arith.constant dense<0.000000e+00> : vector<2x32xf32>
    %4 = tpu.matmul %1, %3, %cst {dimension_numbers = #tpu.dot_dimension_numbers<[1], [0], [0], [1], [0, 0, 1, 1], [], []>} : vector<2x16xf32>, vector<16x32xf32>, vector<2x32xf32> -> vector<2x32xf32>
    %c0_3 = arith.constant 0 : index
    %c0_4 = arith.constant 0 : index
    %5 = vector.load %arg3[%c0_3, %c0_4] : memref<1x32xf32, #tpu.memory_space<vmem>>, vector<1x32xf32>
    %6 = vector.broadcast %5 : vector<1x32xf32> to vector<2x32xf32>
    %7 = arith.addf %4, %6 : vector<2x32xf32>
    %cst_5 = arith.constant 0.000000e+00 : f32
    %8 = vector.broadcast %cst_5 : f32 to vector<2x32xf32>
    %9 = arith.maximumf %7, %8 : vector<2x32xf32>
    %c0_6 = arith.constant 0 : index
    %c0_7 = arith.constant 0 : index
    %10 = vector.load %arg4[%c0_6, %c0_7] : memref<32x32xf32, #tpu.memory_space<vmem>>, vector<32x32xf32>
    %cst_8 = arith.constant dense<0.000000e+00> : vector<2x32xf32>
    %11 = tpu.matmul %9, %10, %cst_8 {dimension_numbers = #tpu.dot_dimension_numbers<[1], [0], [0], [1], [0, 0, 1, 1], [], []>} : vector<2x32xf32>, vector<32x32xf32>, vector<2x32xf32> -> vector<2x32xf32>
    %c0_9 = arith.constant 0 : index
    %c0_10 = arith.constant 0 : index
    %12 = vector.load %arg5[%c0_9, %c0_10] : memref<1x32xf32, #tpu.memory_space<vmem>>, vector<1x32xf32>
    %13 = vector.broadcast %12 : vector<1x32xf32> to vector<2x32xf32>
    %14 = arith.addf %11, %13 : vector<2x32xf32>
    %cst_11 = arith.constant 0.000000e+00 : f32
    %15 = vector.broadcast %cst_11 : f32 to vector<2x32xf32>
    %16 = arith.maximumf %14, %15 : vector<2x32xf32>
    %c0_12 = arith.constant 0 : index
    %c0_13 = arith.constant 0 : index
    %17 = vector.load %arg6[%c0_12, %c0_13] : memref<32x32xf32, #tpu.memory_space<vmem>>, vector<32x32xf32>
    %cst_14 = arith.constant dense<0.000000e+00> : vector<2x32xf32>
    %18 = tpu.matmul %16, %17, %cst_14 {dimension_numbers = #tpu.dot_dimension_numbers<[1], [0], [0], [1], [0, 0, 1, 1], [], []>} : vector<2x32xf32>, vector<32x32xf32>, vector<2x32xf32> -> vector<2x32xf32>
    %c0_15 = arith.constant 0 : index
    %c0_16 = arith.constant 0 : index
    %19 = vector.load %arg7[%c0_15, %c0_16] : memref<1x32xf32, #tpu.memory_space<vmem>>, vector<1x32xf32>
    %20 = vector.broadcast %19 : vector<1x32xf32> to vector<2x32xf32>
    %21 = arith.addf %18, %20 : vector<2x32xf32>
    %22 = vector.extract_strided_slice %21 {offsets = [0, 0], sizes = [2, 16], strides = [1, 1]} : vector<2x32xf32> to vector<2x16xf32>
    %23 = math.tanh %22 : vector<2x16xf32>
    %24 = vector.extract_strided_slice %21 {offsets = [0, 16], sizes = [2, 16], strides = [1, 1]} : vector<2x32xf32> to vector<2x16xf32>
    %25 = math.exp %23 : vector<2x16xf32>
    %26 = arith.mulf %2, %25 : vector<2x16xf32>
    %27 = arith.addf %26, %24 : vector<2x16xf32>
    %28 = tpu.concatenate %1, %27 in 1 : vector<2x16xf32>, vector<2x16xf32> -> vector<2x32xf32>
    %c0_17 = arith.constant 0 : index
    %c0_18 = arith.constant 0 : index
    %29 = vector.load %arg8[%c0_17, %c0_18] : memref<2x32xf32, #tpu.memory_space<vmem>>, vector<2x32xf32>
    tpu.vector_store %arg8[%c0_17, %c0_18], %28 {strides = array<i32>} : memref<2x32xf32, #tpu.memory_space<vmem>>, vector<2x32xf32>,
    %cst_19 = arith.constant dense<0.000000e+00> : vector<2xf32>
    %30 = vector.multi_reduction <add>, %23, %cst_19 [1] : vector<2x16xf32> to vector<2xf32>
    %31 = vector.shape_cast %30 : vector<2xf32> to vector<2x1xf32>
    %c0_20 = arith.constant 0 : index
    %c0_21 = arith.constant 0 : index
    %32 = vector.load %arg9[%c0_20, %c0_21] : memref<2x1xf32, #tpu.memory_space<vmem>>, vector<2x1xf32>
    tpu.vector_store %arg9[%c0_20, %c0_21], %31 {strides = array<i32>} : memref<2x1xf32, #tpu.memory_space<vmem>>, vector<2x1xf32>,
    return
  }
  func.func @transform_0(%arg0: i32) -> (i32, i32) {
    %c0_i32 = arith.constant 0 : i32
    %c0_i32_0 = arith.constant 0 : i32
    return %arg0, %c0_i32 : i32, i32
  }
  func.func @transform_1(%arg0: i32) -> (i32, i32) {
    %c0_i32 = arith.constant 0 : i32
    %c0_i32_0 = arith.constant 0 : i32
    %c0_i32_1 = arith.constant 0 : i32
    return %c0_i32, %c0_i32_0 : i32, i32
  }
  func.func @transform_2(%arg0: i32) -> (i32, i32) {
    %c0_i32 = arith.constant 0 : i32
    %c0_i32_0 = arith.constant 0 : i32
    %c0_i32_1 = arith.constant 0 : i32
    return %c0_i32, %c0_i32_0 : i32, i32
  }
  func.func @transform_3(%arg0: i32) -> (i32, i32) {
    %c0_i32 = arith.constant 0 : i32
    %c0_i32_0 = arith.constant 0 : i32
    %c0_i32_1 = arith.constant 0 : i32
    return %c0_i32, %c0_i32_0 : i32, i32
  }
  func.func @transform_4(%arg0: i32) -> (i32, i32) {
    %c0_i32 = arith.constant 0 : i32
    %c0_i32_0 = arith.constant 0 : i32
    %c0_i32_1 = arith.constant 0 : i32
    return %c0_i32, %c0_i32_0 : i32, i32
  }
  func.func @transform_5(%arg0: i32) -> (i32, i32) {
    %c0_i32 = arith.constant 0 : i32
    %c0_i32_0 = arith.constant 0 : i32
    %c0_i32_1 = arith.constant 0 : i32
    return %c0_i32, %c0_i32_0 : i32, i32
  }
  func.func @transform_6(%arg0: i32) -> (i32, i32) {
    %c0_i32 = arith.constant 0 : i32
    %c0_i32_0 = arith.constant 0 : i32
    %c0_i32_1 = arith.constant 0 : i32
    return %c0_i32, %c0_i32_0 : i32, i32
  }
  func.func @transform_7(%arg0: i32) -> (i32, i32) {
    %c0_i32 = arith.constant 0 : i32
    %c0_i32_0 = arith.constant 0 : i32
    return %arg0, %c0_i32 : i32, i32
  }
  func.func @transform_8(%arg0: i32) -> (i32, i32) {
    %c0_i32 = arith.constant 0 : i32
    %c0_i32_0 = arith.constant 0 : i32
    return %arg0, %c0_i32 : i32, i32
  }
}

module attributes {stable_mosaic.version = 11 : i64} {
  func.func @affine_coupling_kernel(%arg0: i32, %arg1: memref<2x32xf32, #tpu.memory_space<vmem>>, %arg2: memref<16x32xf32, #tpu.memory_space<vmem>>, %arg3: memref<1x32xf32, #tpu.memory_space<vmem>>, %arg4: memref<32x32xf32, #tpu.memory_space<vmem>>, %arg5: memref<1x32xf32, #tpu.memory_space<vmem>>, %arg6: memref<32x32xf32, #tpu.memory_space<vmem>>, %arg7: memref<1x32xf32, #tpu.memory_space<vmem>>, %arg8: memref<2x32xf32, #tpu.memory_space<vmem>>, %arg9: memref<2x1xf32, #tpu.memory_space<vmem>>) attributes {dimension_semantics = [#tpu.dimension_semantics<parallel>], iteration_bounds = array<i64: 1>, scalar_prefetch = 0 : i64, scratch_operands = 0 : i64, tpu.core_type = #tpu.core_type<tc>, window_params = [{transform_indices = @transform_0, window_bounds = array<i64: 2, 32>}, {pipeline_mode = #tpu.pipeline_mode<synchronous>, transform_indices = @transform_1, window_bounds = array<i64: 16, 32>}, {pipeline_mode = #tpu.pipeline_mode<synchronous>, transform_indices = @transform_2, window_bounds = array<i64: 1, 32>}, {pipeline_mode = #tpu.pipeline_mode<synchronous>, transform_indices = @transform_3, window_bounds = array<i64: 32, 32>}, {pipeline_mode = #tpu.pipeline_mode<synchronous>, transform_indices = @transform_4, window_bounds = array<i64: 1, 32>}, {pipeline_mode = #tpu.pipeline_mode<synchronous>, transform_indices = @transform_5, window_bounds = array<i64: 32, 32>}, {pipeline_mode = #tpu.pipeline_mode<synchronous>, transform_indices = @transform_6, window_bounds = array<i64: 1, 32>}, {transform_indices = @transform_7, window_bounds = array<i64: 2, 32>}, {transform_indices = @transform_8, window_bounds = array<i64: 2, 1>}]} {
    %c0 = arith.constant 0 : index
    %c0_0 = arith.constant 0 : index
    %0 = vector.load %arg1[%c0, %c0_0] : memref<2x32xf32, #tpu.memory_space<vmem>>, vector<2x32xf32>
    %1 = vector.extract_strided_slice %0 {offsets = [0, 0], sizes = [2, 16], strides = [1, 1]} : vector<2x32xf32> to vector<2x16xf32>
    %2 = vector.extract_strided_slice %0 {offsets = [0, 16], sizes = [2, 16], strides = [1, 1]} : vector<2x32xf32> to vector<2x16xf32>
    %c0_1 = arith.constant 0 : index
    %c0_2 = arith.constant 0 : index
    %3 = vector.load %arg2[%c0_1, %c0_2] : memref<16x32xf32, #tpu.memory_space<vmem>>, vector<16x32xf32>
    %cst = arith.constant dense<0.000000e+00> : vector<2x32xf32>
    %4 = tpu.matmul %1, %3, %cst {dimension_numbers = #tpu.dot_dimension_numbers<[1], [0], [0], [1], [0, 0, 1, 1], [], []>} : vector<2x16xf32>, vector<16x32xf32>, vector<2x32xf32> -> vector<2x32xf32>
    %c0_3 = arith.constant 0 : index
    %c0_4 = arith.constant 0 : index
    %5 = vector.load %arg3[%c0_3, %c0_4] : memref<1x32xf32, #tpu.memory_space<vmem>>, vector<1x32xf32>
    %6 = vector.broadcast %5 : vector<1x32xf32> to vector<2x32xf32>
    %7 = arith.addf %4, %6 : vector<2x32xf32>
    %cst_5 = arith.constant 0.000000e+00 : f32
    %8 = vector.broadcast %cst_5 : f32 to vector<2x32xf32>
    %9 = arith.maximumf %7, %8 : vector<2x32xf32>
    %c0_6 = arith.constant 0 : index
    %c0_7 = arith.constant 0 : index
    %10 = vector.load %arg4[%c0_6, %c0_7] : memref<32x32xf32, #tpu.memory_space<vmem>>, vector<32x32xf32>
    %cst_8 = arith.constant dense<0.000000e+00> : vector<2x32xf32>
    %11 = tpu.matmul %9, %10, %cst_8 {dimension_numbers = #tpu.dot_dimension_numbers<[1], [0], [0], [1], [0, 0, 1, 1], [], []>} : vector<2x32xf32>, vector<32x32xf32>, vector<2x32xf32> -> vector<2x32xf32>
    %c0_9 = arith.constant 0 : index
    %c0_10 = arith.constant 0 : index
    %12 = vector.load %arg5[%c0_9, %c0_10] : memref<1x32xf32, #tpu.memory_space<vmem>>, vector<1x32xf32>
    %13 = vector.broadcast %12 : vector<1x32xf32> to vector<2x32xf32>
    %14 = arith.addf %11, %13 : vector<2x32xf32>
    %cst_11 = arith.constant 0.000000e+00 : f32
    %15 = vector.broadcast %cst_11 : f32 to vector<2x32xf32>
    %16 = arith.maximumf %14, %15 : vector<2x32xf32>
    %c0_12 = arith.constant 0 : index
    %c0_13 = arith.constant 0 : index
    %17 = vector.load %arg6[%c0_12, %c0_13] : memref<32x32xf32, #tpu.memory_space<vmem>>, vector<32x32xf32>
    %cst_14 = arith.constant dense<0.000000e+00> : vector<2x32xf32>
    %18 = tpu.matmul %16, %17, %cst_14 {dimension_numbers = #tpu.dot_dimension_numbers<[1], [0], [0], [1], [0, 0, 1, 1], [], []>} : vector<2x32xf32>, vector<32x32xf32>, vector<2x32xf32> -> vector<2x32xf32>
    %c0_15 = arith.constant 0 : index
    %c0_16 = arith.constant 0 : index
    %19 = vector.load %arg7[%c0_15, %c0_16] : memref<1x32xf32, #tpu.memory_space<vmem>>, vector<1x32xf32>
    %20 = vector.broadcast %19 : vector<1x32xf32> to vector<2x32xf32>
    %21 = arith.addf %18, %20 : vector<2x32xf32>
    %22 = vector.extract_strided_slice %21 {offsets = [0, 0], sizes = [2, 16], strides = [1, 1]} : vector<2x32xf32> to vector<2x16xf32>
    %23 = math.tanh %22 : vector<2x16xf32>
    %24 = vector.extract_strided_slice %21 {offsets = [0, 16], sizes = [2, 16], strides = [1, 1]} : vector<2x32xf32> to vector<2x16xf32>
    %25 = math.exp %23 : vector<2x16xf32>
    %26 = arith.mulf %2, %25 : vector<2x16xf32>
    %27 = arith.addf %26, %24 : vector<2x16xf32>
    %28 = tpu.concatenate %1, %27 in 1 : vector<2x16xf32>, vector<2x16xf32> -> vector<2x32xf32>
    %c0_17 = arith.constant 0 : index
    %c0_18 = arith.constant 0 : index
    %29 = vector.load %arg8[%c0_17, %c0_18] : memref<2x32xf32, #tpu.memory_space<vmem>>, vector<2x32xf32>
    tpu.vector_store %arg8[%c0_17, %c0_18], %28 {strides = array<i32>} : memref<2x32xf32, #tpu.memory_space<vmem>>, vector<2x32xf32>,
    %cst_19 = arith.constant dense<0.000000e+00> : vector<2xf32>
    %30 = vector.multi_reduction <add>, %23, %cst_19 [1] : vector<2x16xf32> to vector<2xf32>
    %31 = vector.shape_cast %30 : vector<2xf32> to vector<2x1xf32>
    %c0_20 = arith.constant 0 : index
    %c0_21 = arith.constant 0 : index
    %32 = vector.load %arg9[%c0_20, %c0_21] : memref<2x1xf32, #tpu.memory_space<vmem>>, vector<2x1xf32>
    tpu.vector_store %arg9[%c0_20, %c0_21], %31 {strides = array<i32>} : memref<2x1xf32, #tpu.memory_space<vmem>>, vector<2x1xf32>,
    return
  }
  func.func @transform_0(%arg0: i32) -> (i32, i32) {
    %c0_i32 = arith.constant 0 : i32
    %c0_i32_0 = arith.constant 0 : i32
    return %arg0, %c0_i32 : i32, i32
  }
  func.func @transform_1(%arg0: i32) -> (i32, i32) {
    %c0_i32 = arith.constant 0 : i32
    %c0_i32_0 = arith.constant 0 : i32
    %c0_i32_1 = arith.constant 0 : i32
    return %c0_i32, %c0_i32_0 : i32, i32
  }
  func.func @transform_2(%arg0: i32) -> (i32, i32) {
    %c0_i32 = arith.constant 0 : i32
    %c0_i32_0 = arith.constant 0 : i32
    %c0_i32_1 = arith.constant 0 : i32
    return %c0_i32, %c0_i32_0 : i32, i32
  }
  func.func @transform_3(%arg0: i32) -> (i32, i32) {
    %c0_i32 = arith.constant 0 : i32
    %c0_i32_0 = arith.constant 0 : i32
    %c0_i32_1 = arith.constant 0 : i32
    return %c0_i32, %c0_i32_0 : i32, i32
  }
  func.func @transform_4(%arg0: i32) -> (i32, i32) {
    %c0_i32 = arith.constant 0 : i32
    %c0_i32_0 = arith.constant 0 : i32
    %c0_i32_1 = arith.constant 0 : i32
    return %c0_i32, %c0_i32_0 : i32, i32
  }
  func.func @transform_5(%arg0: i32) -> (i32, i32) {
    %c0_i32 = arith.constant 0 : i32
    %c0_i32_0 = arith.constant 0 : i32
    %c0_i32_1 = arith.constant 0 : i32
    return %c0_i32, %c0_i32_0 : i32, i32
  }
  func.func @transform_6(%arg0: i32) -> (i32, i32) {
    %c0_i32 = arith.constant 0 : i32
    %c0_i32_0 = arith.constant 0 : i32
    %c0_i32_1 = arith.constant 0 : i32
    return %c0_i32, %c0_i32_0 : i32, i32
  }
  func.func @transform_7(%arg0: i32) -> (i32, i32) {
    %c0_i32 = arith.constant 0 : i32
    %c0_i32_0 = arith.constant 0 : i32
    return %arg0, %c0_i32 : i32, i32
  }
  func.func @transform_8(%arg0: i32) -> (i32, i32) {
    %c0_i32 = arith.constant 0 : i32
    %c0_i32_0 = arith.constant 0 : i32
    return %arg0, %c0_i32 : i32, i32
  }
}

</mosaic_0001>

<llo_original>
// kernel: tpu_custom_call.1
$region0: #{tpu_custom_call.1}
  #allocation0 [shape = 'u32[]', space=smem, size = 0x4, offset = 0x4, fixed_abs, tag = 'smem constant byte address 0x4 - core index']
  #allocation1 [shape = 'u32[144,128]{1,0:T(1,128)}', space=vmem, size = 0x12000, scoped, tag = 'internal scratch']
  %s0 = inlined_call_operand.hbm [shape: f32[2,32], index: 0, kind: input, shape index: {}]
  %s1 = inlined_call_operand.hbm [shape: f32[16,32], index: 1, kind: input, shape index: {}]
  %s2 = inlined_call_operand.vmem [shape: f32[1,32], index: 2, kind: input, shape index: {}]
  %s3 = inlined_call_operand.hbm [shape: f32[32,32], index: 3, kind: input, shape index: {}]
  %s4 = inlined_call_operand.vmem [shape: f32[1,32], index: 4, kind: input, shape index: {}]
  %s5 = inlined_call_operand.hbm [shape: f32[32,32], index: 5, kind: input, shape index: {}]
  %s6 = inlined_call_operand.vmem [shape: f32[1,32], index: 6, kind: input, shape index: {}]
  %s7 = inlined_call_operand.hbm [shape: f32[2,32], index: 7, kind: output, shape index: {0}]
  %s8 = inlined_call_operand.vmem [shape: f32[2,1], index: 8, kind: output, shape index: {1}]
  %9 = xla_tuple %s7, %s8
  %s10 = sld [smem:[#allocation0]]
  $region62: #{tpu_custom_call.1} parent=0
    _
  %s12 = ssub.s32 1, %s10
  %s13 = scalar_select 0, %s12, %s10
  $region1: #{tpu_custom_call.1} parent=0
    #allocation2 [shape = 'u8[1024]{0}', space=vmem, size = 0x400, scoped, tag = 'input window, operand 0, single buffered']
    #allocation3 [shape = 's32[1]{0}', space=sflag, size = 0x4, scoped, tag = 'scoped memory for tpu_custom_call.1']
    #allocation4 [shape = 's32[1]{0}', space=sflag, size = 0x4, scoped, tag = 'scoped memory for tpu_custom_call.1']
    #allocation5 [shape = 'u8[8192]{0}', space=vmem, size = 0x2000, scoped, tag = 'input window, operand 1, single buffered']
    #allocation6 [shape = 's32[1]{0}', space=sflag, size = 0x4, scoped, tag = 'scoped memory for tpu_custom_call.1']
    #allocation7 [shape = 'u8[16384]{0}', space=vmem, size = 0x4000, scoped, tag = 'input window, operand 3, single buffered']
    #allocation8 [shape = 'u8[16384]{0}', space=vmem, size = 0x4000, scoped, tag = 'input window, operand 5, single buffered']
    #allocation9 [shape = 's32[1]{0}', space=sflag, size = 0x4, scoped, tag = 'scoped memory for tpu_custom_call.1']
    #allocation10 [shape = 'u8[1024]{0}', space=vmem, size = 0x400, scoped, tag = 'output window, operand 0, single buffered']
    %14 = vsyncpa [#allocation3], 0
    %15 = vsyncpa [#allocation6], 0
    %16 = vsyncpa [#allocation9], 0
    %17 = vsyncpa [#allocation4], 0
    // Predicated region
    $region2: #{tpu_custom_call.1} parent=1 // pred_check
      _
    $region3: #{tpu_custom_call.1} parent=1 // pred_check_branch
      %19 = sbr.rel (0) target = $region5
    $region4: #{tpu_custom_call.1} parent=1 // pred_region
      %s21 = ssub.s32 32, 32
      %22 = vsyncadd [#allocation3], %s21
      %s24 = sshll.u32 [#allocation2], 4
      %s25 = int_to_ptr.vmem [resolvable:$true] %s24
      %27 = dma.hbm_to_vmem [thread:$0]  %s0, 32, %s25, [#allocation3]
    $region5: #{tpu_custom_call.1} parent=1 // pred_fallthru
      _
    // Predicated region
    $region6: #{tpu_custom_call.1} parent=1 // pred_check
      _
    $region7: #{tpu_custom_call.1} parent=1 // pred_check_branch
      %29 = sbr.rel (0) target = $region9
    $region8: #{tpu_custom_call.1} parent=1 // pred_region
      %s31 = ssub.s32 256, 256
      %32 = vsyncadd [#allocation6], %s31
      %s33 = sshll.u32 [#allocation5], 4
      %s34 = int_to_ptr.vmem [resolvable:$true] %s33
      %39 = dma.hbm_to_vmem [thread:$0]  %s1, 256, %s34, [#allocation6], 128, 128, 8
    $region9: #{tpu_custom_call.1} parent=1 // pred_fallthru
      _
    // Predicated region
    $region10: #{tpu_custom_call.1} parent=1 // pred_check
      _
    $region11: #{tpu_custom_call.1} parent=1 // pred_check_branch
      %41 = sbr.rel (0) target = $region13
    $region12: #{tpu_custom_call.1} parent=1 // pred_region
      _
    $region13: #{tpu_custom_call.1} parent=1 // pred_fallthru
      _
    // Predicated region
    $region14: #{tpu_custom_call.1} parent=1 // pred_check
      _
    $region15: #{tpu_custom_call.1} parent=1 // pred_check_branch
      %43 = sbr.rel (0) target = $region17
    $region16: #{tpu_custom_call.1} parent=1 // pred_region
      %s45 = ssub.s32 512, 512
      %46 = vsyncadd [#allocation6], %s45
      %s47 = sshll.u32 [#allocation7], 4
      %s48 = int_to_ptr.vmem [resolvable:$true] %s47
      %53 = dma.hbm_to_vmem [thread:$0]  %s3, 512, %s48, [#allocation6], 128, 128, 8
    $region17: #{tpu_custom_call.1} parent=1 // pred_fallthru
      _
    // Predicated region
    $region18: #{tpu_custom_call.1} parent=1 // pred_check
      _
    $region19: #{tpu_custom_call.1} parent=1 // pred_check_branch
      %55 = sbr.rel (0) target = $region21
    $region20: #{tpu_custom_call.1} parent=1 // pred_region
      _
    $region21: #{tpu_custom_call.1} parent=1 // pred_fallthru
      _
    // Predicated region
    $region22: #{tpu_custom_call.1} parent=1 // pred_check
      _
    $region23: #{tpu_custom_call.1} parent=1 // pred_check_branch
      %57 = sbr.rel (0) target = $region25
    $region24: #{tpu_custom_call.1} parent=1 // pred_region
      %s59 = ssub.s32 512, 512
      %60 = vsyncadd [#allocation9], %s59
      %s61 = sshll.u32 [#allocation8], 4
      %s62 = int_to_ptr.vmem [resolvable:$true] %s61
      %67 = dma.hbm_to_vmem [thread:$0]  %s5, 512, %s62, [#allocation9], 128, 128, 8
    $region25: #{tpu_custom_call.1} parent=1 // pred_fallthru
      _
    // Predicated region
    $region26: #{tpu_custom_call.1} parent=1 // pred_check
      _
    $region27: #{tpu_custom_call.1} parent=1 // pred_check_branch
      %69 = sbr.rel (0) target = $region29
    $region28: #{tpu_custom_call.1} parent=1 // pred_region
      _
    $region29: #{tpu_custom_call.1} parent=1 // pred_fallthru
      _
    // Predicated region
    $region30: #{tpu_custom_call.1} parent=1 // pred_check
      _
    $region31: #{tpu_custom_call.1} parent=1 // pred_check_branch
      %71 = sbr.rel (0) target = $region33
    $region32: #{tpu_custom_call.1} parent=1 // pred_region
      %72 = dma.done [#allocation3], 32
    $region33: #{tpu_custom_call.1} parent=1 // pred_fallthru
      _
    // Predicated region
    $region34: #{tpu_custom_call.1} parent=1 // pred_check
      _
    $region35: #{tpu_custom_call.1} parent=1 // pred_check_branch
      %74 = sbr.rel (0) target = $region37
    $region36: #{tpu_custom_call.1} parent=1 // pred_region
      %75 = dma.done [#allocation6], 256
    $region37: #{tpu_custom_call.1} parent=1 // pred_fallthru
      _
    // Predicated region
    $region38: #{tpu_custom_call.1} parent=1 // pred_check
      _
    $region39: #{tpu_custom_call.1} parent=1 // pred_check_branch
      %77 = sbr.rel (0) target = $region41
    $region40: #{tpu_custom_call.1} parent=1 // pred_region
      %78 = dma.done [#allocation6], 512
    $region41: #{tpu_custom_call.1} parent=1 // pred_fallthru
      _
    // Predicated region
    $region42: #{tpu_custom_call.1} parent=1 // pred_check
      _
    $region43: #{tpu_custom_call.1} parent=1 // pred_check_branch
      %80 = sbr.rel (0) target = $region45
    $region44: #{tpu_custom_call.1} parent=1 // pred_region
      %81 = dma.done [#allocation9], 512
    $region45: #{tpu_custom_call.1} parent=1 // pred_fallthru
      _
    %v82 = vld [vmem:[#allocation2] sm:$0x3]
    %v83 = vld [vmem:[#allocation5] sm:$0xff]
    %v84 = vld [vmem:[#allocation5 + $0x8] sm:$0xff]
    %v85 = vld [vmem:[%s2] sm:$0x1]
    %v87 = vlaneseq
    %v88 = vshrl.u32 %v87, 7
    %v89 = vsub.s32 0, %v88
    %v90 = vrot.slane %v85, %v89
    %vm92 = vcmask 130048
    %v94 = vsel %vm92, %v82, 0
    %96 = vmatprep.subr.mxu0 0.0
    %97 = vmatpush1.msra.mxu0 %v83
    %98 = vmatprep.subr.mxu0 0.0
    %99 = vmatpush1.msra.mxu0 %v84
    %100 = vmatprep.subr.mxu0 0.0
    %101 = vmatpush1.msra.mxu0 0.0
    %102 = vmatprep.subr.mxu0 0.0
    %103 = vmatpush1.msra.mxu0 0.0
    %104 = vmatprep.subr.mxu0 0.0
    %105 = vmatpush1.msra.mxu0 0.0
    %106 = vmatprep.subr.mxu0 0.0
    %107 = vmatpush1.msra.mxu0 0.0
    %108 = vmatprep.subr.mxu0 0.0
    %109 = vmatpush1.msra.mxu0 0.0
    %110 = vmatprep.subr.mxu0 0.0
    %111 = vmatpush1.msra.mxu0 0.0
    %112 = vmatprep.subr.mxu0 0.0
    %113 = vmatpush1.msra.mxu0 0.0
    %114 = vmatprep.subr.mxu0 0.0
    %115 = vmatpush1.msra.mxu0 0.0
    %116 = vmatprep.subr.mxu0 0.0
    %117 = vmatpush1.msra.mxu0 0.0
    %118 = vmatprep.subr.mxu0 0.0
    %119 = vmatpush1.msra.mxu0 0.0
    %120 = vmatprep.subr.mxu0 0.0
    %121 = vmatpush1.msra.mxu0 0.0
    %122 = vmatprep.subr.mxu0 0.0
    %123 = vmatpush1.msra.mxu0 0.0
    %124 = vmatprep.subr.mxu0 0.0
    %125 = vmatpush1.msra.mxu0 0.0
    %126 = vmatprep.subr.mxu0 0.0
    %127 = vmatpush1.msra.mxu0 0.0
    %128 = vmatprep.subr.mxu0 0.0
    %129 = vmatpush1.msra.mxu0 0.0
    %130 = vmatprep.subr.mxu0 0.0
    %131 = vmatpush1.msra.mxu0 0.0
    %132 = vmatprep.subr.mxu0 0.0
    %133 = vmatpush1.msra.mxu0 0.0
    %134 = vmatprep.subr.mxu0 0.0
    %135 = vmatpush1.msra.mxu0 0.0
    %136 = vmatprep.subr.mxu0 0.0
    %137 = vmatpush1.msra.mxu0 0.0
    %138 = vmatprep.subr.mxu0 0.0
    %139 = vmatpush1.msra.mxu0 0.0
    %140 = vmatprep.subr.mxu0 0.0
    %141 = vmatpush1.msra.mxu0 0.0
    %142 = vmatprep.subr.mxu0 0.0
    %143 = vmatpush1.msra.mxu0 0.0
    %144 = vmatprep.subr.mxu0 0.0
    %145 = vmatpush1.msra.mxu0 0.0
    %146 = vmatprep.subr.mxu0 0.0
    %147 = vmatpush1.msra.mxu0 0.0
    %148 = vmatprep.subr.mxu0 0.0
    %149 = vmatpush1.msra.mxu0 0.0
    %150 = vmatprep.subr.mxu0 0.0
    %151 = vmatpush1.msra.mxu0 0.0
    %152 = vmatprep.subr.mxu0 0.0
    %153 = vmatpush1.msra.mxu0 0.0
    %154 = vmatprep.subr.mxu0 0.0
    %155 = vmatpush1.msra.mxu0 0.0
    %156 = vmatprep.subr.mxu0 0.0
    %157 = vmatpush1.msra.mxu0 0.0
    %158 = vmatprep.subr.mxu0 0.0
    %159 = vmatpush1.msra.mxu0 0.0
    %160 = vmatprep.mubr.f32.mxu0 0.0
    %161 = vmatmul.mubr.f32.gmra.mrb[0].mxu0 %v94
    %v162 = vpop.f32.mrb[0].mxu0
    %v163 = vadd.f32 %v90, %v162
    %v164 = vpop.f32.mrb[0].mxu0
    %165 = vdwg.mxu0
    %v166 = vmax.f32 %v163, 0.0
    %v167 = vld [vmem:[#allocation7] sm:$0xff]
    %v168 = vld [vmem:[#allocation7 + $0x8] sm:$0xff]
    %v169 = vld [vmem:[#allocation7 + $0x10] sm:$0xff]
    %v170 = vld [vmem:[#allocation7 + $0x18] sm:$0xff]
    %v171 = vld [vmem:[%s4] sm:$0x1]
    %v173 = vlaneseq
    %v174 = vshrl.u32 %v173, 7
    %v175 = vsub.s32 0, %v174
    %v176 = vrot.slane %v171, %v175
    %vm178 = vcmask 261120
    %v180 = vsel %vm178, %v166, 0
    %182 = vmatprep.subr.mxu0 0.0
    %183 = vmatpush1.msra.mxu0 %v167
    %184 = vmatprep.subr.mxu0 0.0
    %185 = vmatpush1.msra.mxu0 %v168
    %186 = vmatprep.subr.mxu0 0.0
    %187 = vmatpush1.msra.mxu0 %v169
    %188 = vmatprep.subr.mxu0 0.0
    %189 = vmatpush1.msra.mxu0 %v170
    %190 = vmatprep.subr.mxu0 0.0
    %191 = vmatpush1.msra.mxu0 0.0
    %192 = vmatprep.subr.mxu0 0.0
    %193 = vmatpush1.msra.mxu0 0.0
    %194 = vmatprep.subr.mxu0 0.0
    %195 = vmatpush1.msra.mxu0 0.0
    %196 = vmatprep.subr.mxu0 0.0
    %197 = vmatpush1.msra.mxu0 0.0
    %198 = vmatprep.subr.mxu0 0.0
    %199 = vmatpush1.msra.mxu0 0.0
    %200 = vmatprep.subr.mxu0 0.0
    %201 = vmatpush1.msra.mxu0 0.0
    %202 = vmatprep.subr.mxu0 0.0
    %203 = vmatpush1.msra.mxu0 0.0
    %204 = vmatprep.subr.mxu0 0.0
    %205 = vmatpush1.msra.mxu0 0.0
    %206 = vmatprep.subr.mxu0 0.0
    %207 = vmatpush1.msra.mxu0 0.0
    %208 = vmatprep.subr.mxu0 0.0
    %209 = vmatpush1.msra.mxu0 0.0
    %210 = vmatprep.subr.mxu0 0.0
    %211 = vmatpush1.msra.mxu0 0.0
    %212 = vmatprep.subr.mxu0 0.0
    %213 = vmatpush1.msra.mxu0 0.0
    %214 = vmatprep.subr.mxu0 0.0
    %215 = vmatpush1.msra.mxu0 0.0
    %216 = vmatprep.subr.mxu0 0.0
    %217 = vmatpush1.msra.mxu0 0.0
    %218 = vmatprep.subr.mxu0 0.0
    %219 = vmatpush1.msra.mxu0 0.0
    %220 = vmatprep.subr.mxu0 0.0
    %221 = vmatpush1.msra.mxu0 0.0
    %222 = vmatprep.subr.mxu0 0.0
    %223 = vmatpush1.msra.mxu0 0.0
    %224 = vmatprep.subr.mxu0 0.0
    %225 = vmatpush1.msra.mxu0 0.0
    %226 = vmatprep.subr.mxu0 0.0
    %227 = vmatpush1.msra.mxu0 0.0
    %228 = vmatprep.subr.mxu0 0.0
    %229 = vmatpush1.msra.mxu0 0.0
    %230 = vmatprep.subr.mxu0 0.0
    %231 = vmatpush1.msra.mxu0 0.0
    %232 = vmatprep.subr.mxu0 0.0
    %233 = vmatpush1.msra.mxu0 0.0
    %234 = vmatprep.subr.mxu0 0.0
    %235 = vmatpush1.msra.mxu0 0.0
    %236 = vmatprep.subr.mxu0 0.0
    %237 = vmatpush1.msra.mxu0 0.0
    %238 = vmatprep.subr.mxu0 0.0
    %239 = vmatpush1.msra.mxu0 0.0
    %240 = vmatprep.subr.mxu0 0.0
    %241 = vmatpush1.msra.mxu0 0.0
    %242 = vmatprep.subr.mxu0 0.0
    %243 = vmatpush1.msra.mxu0 0.0
    %244 = vmatprep.subr.mxu0 0.0
    %245 = vmatpush1.msra.mxu0 0.0
    %246 = vmatprep.mubr.f32.mxu0 0.0
    %247 = vmatmul.mubr.f32.gmra.mrb[0].mxu0 %v180
    %v248 = vpop.f32.mrb[0].mxu0
    %v249 = vadd.f32 %v176, %v248
    %v250 = vpop.f32.mrb[0].mxu0
    %251 = vdwg.mxu0
    %v252 = vmax.f32 %v249, 0.0
    %v253 = vld [vmem:[#allocation8] sm:$0xff]
    %v254 = vld [vmem:[#allocation8 + $0x8] sm:$0xff]
    %v255 = vld [vmem:[#allocation8 + $0x10] sm:$0xff]
    %v256 = vld [vmem:[#allocation8 + $0x18] sm:$0xff]
    %v257 = vld [vmem:[%s6] sm:$0x1]
    %v259 = vlaneseq
    %v260 = vshrl.u32 %v259, 7
    %v261 = vsub.s32 0, %v260
    %v262 = vrot.slane %v257, %v261
    %v265 = vsel %vm178, %v252, 0
    %267 = vmatprep.subr.mxu0 0.0
    %268 = vmatpush1.msra.mxu0 %v253
    %269 = vmatprep.subr.mxu0 0.0
    %270 = vmatpush1.msra.mxu0 %v254
    %271 = vmatprep.subr.mxu0 0.0
    %272 = vmatpush1.msra.mxu0 %v255
    %273 = vmatprep.subr.mxu0 0.0
    %274 = vmatpush1.msra.mxu0 %v256
    %275 = vmatprep.subr.mxu0 0.0
    %276 = vmatpush1.msra.mxu0 0.0
    %277 = vmatprep.subr.mxu0 0.0
    %278 = vmatpush1.msra.mxu0 0.0
    %279 = vmatprep.subr.mxu0 0.0
    %280 = vmatpush1.msra.mxu0 0.0
    %281 = vmatprep.subr.mxu0 0.0
    %282 = vmatpush1.msra.mxu0 0.0
    %283 = vmatprep.subr.mxu0 0.0
    %284 = vmatpush1.msra.mxu0 0.0
    %285 = vmatprep.subr.mxu0 0.0
    %286 = vmatpush1.msra.mxu0 0.0
    %287 = vmatprep.subr.mxu0 0.0
    %288 = vmatpush1.msra.mxu0 0.0
    %289 = vmatprep.subr.mxu0 0.0
    %290 = vmatpush1.msra.mxu0 0.0
    %291 = vmatprep.subr.mxu0 0.0
    %292 = vmatpush1.msra.mxu0 0.0
    %293 = vmatprep.subr.mxu0 0.0
    %294 = vmatpush1.msra.mxu0 0.0
    %295 = vmatprep.subr.mxu0 0.0
    %296 = vmatpush1.msra.mxu0 0.0
    %297 = vmatprep.subr.mxu0 0.0
    %298 = vmatpush1.msra.mxu0 0.0
    %299 = vmatprep.subr.mxu0 0.0
    %300 = vmatpush1.msra.mxu0 0.0
    %301 = vmatprep.subr.mxu0 0.0
    %302 = vmatpush1.msra.mxu0 0.0
    %303 = vmatprep.subr.mxu0 0.0
    %304 = vmatpush1.msra.mxu0 0.0
    %305 = vmatprep.subr.mxu0 0.0
    %306 = vmatpush1.msra.mxu0 0.0
    %307 = vmatprep.subr.mxu0 0.0
    %308 = vmatpush1.msra.mxu0 0.0
    %309 = vmatprep.subr.mxu0 0.0
    %310 = vmatpush1.msra.mxu0 0.0
    %311 = vmatprep.subr.mxu0 0.0
    %312 = vmatpush1.msra.mxu0 0.0
    %313 = vmatprep.subr.mxu0 0.0
    %314 = vmatpush1.msra.mxu0 0.0
    %315 = vmatprep.subr.mxu0 0.0
    %316 = vmatpush1.msra.mxu0 0.0
    %317 = vmatprep.subr.mxu0 0.0
    %318 = vmatpush1.msra.mxu0 0.0
    %319 = vmatprep.subr.mxu0 0.0
    %320 = vmatpush1.msra.mxu0 0.0
    %321 = vmatprep.subr.mxu0 0.0
    %322 = vmatpush1.msra.mxu0 0.0
    %323 = vmatprep.subr.mxu0 0.0
    %324 = vmatpush1.msra.mxu0 0.0
    %325 = vmatprep.subr.mxu0 0.0
    %326 = vmatpush1.msra.mxu0 0.0
    %327 = vmatprep.subr.mxu0 0.0
    %328 = vmatpush1.msra.mxu0 0.0
    %329 = vmatprep.subr.mxu0 0.0
    %330 = vmatpush1.msra.mxu0 0.0
    %331 = vmatprep.mubr.f32.mxu0 0.0
    %332 = vmatmul.mubr.f32.gmra.mrb[0].mxu0 %v265
    %v333 = vpop.f32.mrb[0].mxu0
    %v334 = vadd.f32 %v262, %v333
    %v335 = vpop.f32.mrb[0].mxu0
    %336 = vdwg.mxu0
    %v337 = vtanh.pop %v334
    %v338 = vmul.f32 %v337, 1.442695
    %v339 = vpow.pop %v338
    %341 = vrot.lane.b32.xlu0 %v339, 16
    %v342 = vpop.permute.xlu0 %341
    %v344 = vmul.f32 %v82, %v342
    %v345 = vadd.f32 %v344, %v334
    %v346 = vsel %vm92, %v82, %v345
    %vm347 = vcmask 254976
    %348 = vst.msk [vmem:[#allocation10] sm:$0x3] %vm347, %v346
    %vm349 = vcmask 123904
    %v350 = vsel %vm349, %v337, 0.0
    %351 = vadd.xlane.f32.xlu0 %v350
    %v352 = vpop.xlane.xlu0 %351
    %vm353 = vcmask 1024
    %354 = vst.msk [vmem:[%s8] sm:$0x3] %vm353, %v352
    // Predicated region
    $region46: #{tpu_custom_call.1} parent=1 // pred_check
      _
    $region47: #{tpu_custom_call.1} parent=1 // pred_check_branch
      %356 = sbr.rel (0) target = $region49
    $region48: #{tpu_custom_call.1} parent=1 // pred_region
      %s358 = ssub.s32 32, 32
      %359 = vsyncadd [#allocation4], %s358
      %s361 = sshll.u32 [#allocation10], 4
      %s362 = int_to_ptr.vmem [resolvable:$true] %s361
      %364 = dma.vmem_to_hbm [thread:$0]  %s362, 32, %s7, [#allocation4]
    $region49: #{tpu_custom_call.1} parent=1 // pred_fallthru
      _
    // Predicated region
    $region50: #{tpu_custom_call.1} parent=1 // pred_check
      _
    $region51: #{tpu_custom_call.1} parent=1 // pred_check_branch
      %366 = sbr.rel (0) target = $region53
    $region52: #{tpu_custom_call.1} parent=1 // pred_region
      _
    $region53: #{tpu_custom_call.1} parent=1 // pred_fallthru
      _
    // Predicated region
    $region54: #{tpu_custom_call.1} parent=1 // pred_check
      _
    $region55: #{tpu_custom_call.1} parent=1 // pred_check_branch
      %368 = sbr.rel (0) target = $region57
    $region56: #{tpu_custom_call.1} parent=1 // pred_region
      %369 = dma.done [#allocation4], 32
    $region57: #{tpu_custom_call.1} parent=1 // pred_fallthru
      _
    // Predicated region
    $region58: #{tpu_custom_call.1} parent=1 // pred_check
      _
    $region59: #{tpu_custom_call.1} parent=1 // pred_check_branch
      %371 = sbr.rel (0) target = $region61
    $region60: #{tpu_custom_call.1} parent=1 // pred_region
      _
    $region61: #{tpu_custom_call.1} parent=1 // pred_fallthru
      _
    %372 = vsyncpa [#allocation3], 1
    %373 = vsyncpa [#allocation6], 1
    %374 = vsyncpa [#allocation9], 1
    %375 = vsyncpa [#allocation4], 1

// kernel: tpu_custom_call.1
$region0: #{tpu_custom_call.1}
  #allocation0 [shape = 'u32[]', space=smem, size = 0x4, offset = 0x4, fixed_abs, tag = 'smem constant byte address 0x4 - core index']
  #allocation1 [shape = 'u32[144,128]{1,0:T(1,128)}', space=vmem, size = 0x12000, scoped, tag = 'internal scratch']
  %s0 = inlined_call_operand.hbm [shape: f32[2,32], index: 0, kind: input, shape index: {}]
  %s1 = inlined_call_operand.hbm [shape: f32[16,32], index: 1, kind: input, shape index: {}]
  %s2 = inlined_call_operand.vmem [shape: f32[1,32], index: 2, kind: input, shape index: {}]
  %s3 = inlined_call_operand.hbm [shape: f32[32,32], index: 3, kind: input, shape index: {}]
  %s4 = inlined_call_operand.vmem [shape: f32[1,32], index: 4, kind: input, shape index: {}]
  %s5 = inlined_call_operand.hbm [shape: f32[32,32], index: 5, kind: input, shape index: {}]
  %s6 = inlined_call_operand.vmem [shape: f32[1,32], index: 6, kind: input, shape index: {}]
  %s7 = inlined_call_operand.hbm [shape: f32[2,32], index: 7, kind: output, shape index: {0}]
  %s8 = inlined_call_operand.vmem [shape: f32[2,1], index: 8, kind: output, shape index: {1}]
  %9 = xla_tuple %s7, %s8
  %s10 = sld [smem:[#allocation0]]
  $region62: #{tpu_custom_call.1} parent=0
    _
  %s12 = ssub.s32 1, %s10
  %s13 = scalar_select 0, %s12, %s10
  $region1: #{tpu_custom_call.1} parent=0
    #allocation2 [shape = 'u8[1024]{0}', space=vmem, size = 0x400, scoped, tag = 'input window, operand 0, single buffered']
    #allocation3 [shape = 's32[1]{0}', space=sflag, size = 0x4, scoped, tag = 'scoped memory for tpu_custom_call.1']
    #allocation4 [shape = 's32[1]{0}', space=sflag, size = 0x4, scoped, tag = 'scoped memory for tpu_custom_call.1']
    #allocation5 [shape = 'u8[8192]{0}', space=vmem, size = 0x2000, scoped, tag = 'input window, operand 1, single buffered']
    #allocation6 [shape = 's32[1]{0}', space=sflag, size = 0x4, scoped, tag = 'scoped memory for tpu_custom_call.1']
    #allocation7 [shape = 'u8[16384]{0}', space=vmem, size = 0x4000, scoped, tag = 'input window, operand 3, single buffered']
    #allocation8 [shape = 'u8[16384]{0}', space=vmem, size = 0x4000, scoped, tag = 'input window, operand 5, single buffered']
    #allocation9 [shape = 's32[1]{0}', space=sflag, size = 0x4, scoped, tag = 'scoped memory for tpu_custom_call.1']
    #allocation10 [shape = 'u8[1024]{0}', space=vmem, size = 0x400, scoped, tag = 'output window, operand 0, single buffered']
    %14 = vsyncpa [#allocation3], 0
    %15 = vsyncpa [#allocation6], 0
    %16 = vsyncpa [#allocation9], 0
    %17 = vsyncpa [#allocation4], 0
    // Predicated region
    $region2: #{tpu_custom_call.1} parent=1 // pred_check
      _
    $region3: #{tpu_custom_call.1} parent=1 // pred_check_branch
      %19 = sbr.rel (0) target = $region5
    $region4: #{tpu_custom_call.1} parent=1 // pred_region
      %s21 = ssub.s32 32, 32
      %22 = vsyncadd [#allocation3], %s21
      %s24 = sshll.u32 [#allocation2], 4
      %s25 = int_to_ptr.vmem [resolvable:$true] %s24
      %27 = dma.hbm_to_vmem [thread:$0]  %s0, 32, %s25, [#allocation3]
    $region5: #{tpu_custom_call.1} parent=1 // pred_fallthru
      _
    // Predicated region
    $region6: #{tpu_custom_call.1} parent=1 // pred_check
      _
    $region7: #{tpu_custom_call.1} parent=1 // pred_check_branch
      %29 = sbr.rel (0) target = $region9
    $region8: #{tpu_custom_call.1} parent=1 // pred_region
      %s31 = ssub.s32 256, 256
      %32 = vsyncadd [#allocation6], %s31
      %s33 = sshll.u32 [#allocation5], 4
      %s34 = int_to_ptr.vmem [resolvable:$true] %s33
      %39 = dma.hbm_to_vmem [thread:$0]  %s1, 256, %s34, [#allocation6], 128, 128, 8
    $region9: #{tpu_custom_call.1} parent=1 // pred_fallthru
      _
    // Predicated region
    $region10: #{tpu_custom_call.1} parent=1 // pred_check
      _
    $region11: #{tpu_custom_call.1} parent=1 // pred_check_branch
      %41 = sbr.rel (0) target = $region13
    $region12: #{tpu_custom_call.1} parent=1 // pred_region
      _
    $region13: #{tpu_custom_call.1} parent=1 // pred_fallthru
      _
    // Predicated region
    $region14: #{tpu_custom_call.1} parent=1 // pred_check
      _
    $region15: #{tpu_custom_call.1} parent=1 // pred_check_branch
      %43 = sbr.rel (0) target = $region17
    $region16: #{tpu_custom_call.1} parent=1 // pred_region
      %s45 = ssub.s32 512, 512
      %46 = vsyncadd [#allocation6], %s45
      %s47 = sshll.u32 [#allocation7], 4
      %s48 = int_to_ptr.vmem [resolvable:$true] %s47
      %53 = dma.hbm_to_vmem [thread:$0]  %s3, 512, %s48, [#allocation6], 128, 128, 8
    $region17: #{tpu_custom_call.1} parent=1 // pred_fallthru
      _
    // Predicated region
    $region18: #{tpu_custom_call.1} parent=1 // pred_check
      _
    $region19: #{tpu_custom_call.1} parent=1 // pred_check_branch
      %55 = sbr.rel (0) target = $region21
    $region20: #{tpu_custom_call.1} parent=1 // pred_region
      _
    $region21: #{tpu_custom_call.1} parent=1 // pred_fallthru
      _
    // Predicated region
    $region22: #{tpu_custom_call.1} parent=1 // pred_check
      _
    $region23: #{tpu_custom_call.1} parent=1 // pred_check_branch
      %57 = sbr.rel (0) target = $region25
    $region24: #{tpu_custom_call.1} parent=1 // pred_region
      %s59 = ssub.s32 512, 512
      %60 = vsyncadd [#allocation9], %s59
      %s61 = sshll.u32 [#allocation8], 4
      %s62 = int_to_ptr.vmem [resolvable:$true] %s61
      %67 = dma.hbm_to_vmem [thread:$0]  %s5, 512, %s62, [#allocation9], 128, 128, 8
    $region25: #{tpu_custom_call.1} parent=1 // pred_fallthru
      _
    // Predicated region
    $region26: #{tpu_custom_call.1} parent=1 // pred_check
      _
    $region27: #{tpu_custom_call.1} parent=1 // pred_check_branch
      %69 = sbr.rel (0) target = $region29
    $region28: #{tpu_custom_call.1} parent=1 // pred_region
      _
    $region29: #{tpu_custom_call.1} parent=1 // pred_fallthru
      _
    // Predicated region
    $region30: #{tpu_custom_call.1} parent=1 // pred_check
      _
    $region31: #{tpu_custom_call.1} parent=1 // pred_check_branch
      %71 = sbr.rel (0) target = $region33
    $region32: #{tpu_custom_call.1} parent=1 // pred_region
      %72 = dma.done [#allocation3], 32
    $region33: #{tpu_custom_call.1} parent=1 // pred_fallthru
      _
    // Predicated region
    $region34: #{tpu_custom_call.1} parent=1 // pred_check
      _
    $region35: #{tpu_custom_call.1} parent=1 // pred_check_branch
      %74 = sbr.rel (0) target = $region37
    $region36: #{tpu_custom_call.1} parent=1 // pred_region
      %75 = dma.done [#allocation6], 256
    $region37: #{tpu_custom_call.1} parent=1 // pred_fallthru
      _
    // Predicated region
    $region38: #{tpu_custom_call.1} parent=1 // pred_check
      _
    $region39: #{tpu_custom_call.1} parent=1 // pred_check_branch
      %77 = sbr.rel (0) target = $region41
    $region40: #{tpu_custom_call.1} parent=1 // pred_region
      %78 = dma.done [#allocation6], 512
    $region41: #{tpu_custom_call.1} parent=1 // pred_fallthru
      _
    // Predicated region
    $region42: #{tpu_custom_call.1} parent=1 // pred_check
      _
    $region43: #{tpu_custom_call.1} parent=1 // pred_check_branch
      %80 = sbr.rel (0) target = $region45
    $region44: #{tpu_custom_call.1} parent=1 // pred_region
      %81 = dma.done [#allocation9], 512
    $region45: #{tpu_custom_call.1} parent=1 // pred_fallthru
      _
    %v82 = vld [vmem:[#allocation2] sm:$0x3]
    %v83 = vld [vmem:[#allocation5] sm:$0xff]
    %v84 = vld [vmem:[#allocation5 + $0x8] sm:$0xff]
    %v85 = vld [vmem:[%s2] sm:$0x1]
    %v87 = vlaneseq
    %v88 = vshrl.u32 %v87, 7
    %v89 = vsub.s32 0, %v88
    %v90 = vrot.slane %v85, %v89
    %vm92 = vcmask 130048
    %v94 = vsel %vm92, %v82, 0
    %96 = vmatprep.subr.mxu0 0.0
    %97 = vmatpush1.msra.mxu0 %v83
    %98 = vmatprep.subr.mxu0 0.0
    %99 = vmatpush1.msra.mxu0 %v84
    %100 = vmatprep.subr.mxu0 0.0
    %101 = vmatpush1.msra.mxu0 0.0
    %102 = vmatprep.subr.mxu0 0.0
    %103 = vmatpush1.msra.mxu0 0.0
    %104 = vmatprep.subr.mxu0 0.0
    %105 = vmatpush1.msra.mxu0 0.0
    %106 = vmatprep.subr.mxu0 0.0
    %107 = vmatpush1.msra.mxu0 0.0
    %108 = vmatprep.subr.mxu0 0.0
    %109 = vmatpush1.msra.mxu0 0.0
    %110 = vmatprep.subr.mxu0 0.0
    %111 = vmatpush1.msra.mxu0 0.0
    %112 = vmatprep.subr.mxu0 0.0
    %113 = vmatpush1.msra.mxu0 0.0
    %114 = vmatprep.subr.mxu0 0.0
    %115 = vmatpush1.msra.mxu0 0.0
    %116 = vmatprep.subr.mxu0 0.0
    %117 = vmatpush1.msra.mxu0 0.0
    %118 = vmatprep.subr.mxu0 0.0
    %119 = vmatpush1.msra.mxu0 0.0
    %120 = vmatprep.subr.mxu0 0.0
    %121 = vmatpush1.msra.mxu0 0.0
    %122 = vmatprep.subr.mxu0 0.0
    %123 = vmatpush1.msra.mxu0 0.0
    %124 = vmatprep.subr.mxu0 0.0
    %125 = vmatpush1.msra.mxu0 0.0
    %126 = vmatprep.subr.mxu0 0.0
    %127 = vmatpush1.msra.mxu0 0.0
    %128 = vmatprep.subr.mxu0 0.0
    %129 = vmatpush1.msra.mxu0 0.0
    %130 = vmatprep.subr.mxu0 0.0
    %131 = vmatpush1.msra.mxu0 0.0
    %132 = vmatprep.subr.mxu0 0.0
    %133 = vmatpush1.msra.mxu0 0.0
    %134 = vmatprep.subr.mxu0 0.0
    %135 = vmatpush1.msra.mxu0 0.0
    %136 = vmatprep.subr.mxu0 0.0
    %137 = vmatpush1.msra.mxu0 0.0
    %138 = vmatprep.subr.mxu0 0.0
    %139 = vmatpush1.msra.mxu0 0.0
    %140 = vmatprep.subr.mxu0 0.0
    %141 = vmatpush1.msra.mxu0 0.0
    %142 = vmatprep.subr.mxu0 0.0
    %143 = vmatpush1.msra.mxu0 0.0
    %144 = vmatprep.subr.mxu0 0.0
    %145 = vmatpush1.msra.mxu0 0.0
    %146 = vmatprep.subr.mxu0 0.0
    %147 = vmatpush1.msra.mxu0 0.0
    %148 = vmatprep.subr.mxu0 0.0
    %149 = vmatpush1.msra.mxu0 0.0
    %150 = vmatprep.subr.mxu0 0.0
    %151 = vmatpush1.msra.mxu0 0.0
    %152 = vmatprep.subr.mxu0 0.0
    %153 = vmatpush1.msra.mxu0 0.0
    %154 = vmatprep.subr.mxu0 0.0
    %155 = vmatpush1.msra.mxu0 0.0
    %156 = vmatprep.subr.mxu0 0.0
    %157 = vmatpush1.msra.mxu0 0.0
    %158 = vmatprep.subr.mxu0 0.0
    %159 = vmatpush1.msra.mxu0 0.0
    %160 = vmatprep.mubr.f32.mxu0 0.0
    %161 = vmatmul.mubr.f32.gmra.mrb[0].mxu0 %v94
    %v162 = vpop.f32.mrb[0].mxu0
    %v163 = vadd.f32 %v90, %v162
    %v164 = vpop.f32.mrb[0].mxu0
    %165 = vdwg.mxu0
    %v166 = vmax.f32 %v163, 0.0
    %v167 = vld [vmem:[#allocation7] sm:$0xff]
    %v168 = vld [vmem:[#allocation7 + $0x8] sm:$0xff]
    %v169 = vld [vmem:[#allocation7 + $0x10] sm:$0xff]
    %v170 = vld [vmem:[#allocation7 + $0x18] sm:$0xff]
    %v171 = vld [vmem:[%s4] sm:$0x1]
    %v173 = vlaneseq
    %v174 = vshrl.u32 %v173, 7
    %v175 = vsub.s32 0, %v174
    %v176 = vrot.slane %v171, %v175
    %vm178 = vcmask 261120
    %v180 = vsel %vm178, %v166, 0
    %182 = vmatprep.subr.mxu0 0.0
    %183 = vmatpush1.msra.mxu0 %v167
    %184 = vmatprep.subr.mxu0 0.0
    %185 = vmatpush1.msra.mxu0 %v168
    %186 = vmatprep.subr.mxu0 0.0
    %187 = vmatpush1.msra.mxu0 %v169
    %188 = vmatprep.subr.mxu0 0.0
    %189 = vmatpush1.msra.mxu0 %v170
    %190 = vmatprep.subr.mxu0 0.0
    %191 = vmatpush1.msra.mxu0 0.0
    %192 = vmatprep.subr.mxu0 0.0
    %193 = vmatpush1.msra.mxu0 0.0
    %194 = vmatprep.subr.mxu0 0.0
    %195 = vmatpush1.msra.mxu0 0.0
    %196 = vmatprep.subr.mxu0 0.0
    %197 = vmatpush1.msra.mxu0 0.0
    %198 = vmatprep.subr.mxu0 0.0
    %199 = vmatpush1.msra.mxu0 0.0
    %200 = vmatprep.subr.mxu0 0.0
    %201 = vmatpush1.msra.mxu0 0.0
    %202 = vmatprep.subr.mxu0 0.0
    %203 = vmatpush1.msra.mxu0 0.0
    %204 = vmatprep.subr.mxu0 0.0
    %205 = vmatpush1.msra.mxu0 0.0
    %206 = vmatprep.subr.mxu0 0.0
    %207 = vmatpush1.msra.mxu0 0.0
    %208 = vmatprep.subr.mxu0 0.0
    %209 = vmatpush1.msra.mxu0 0.0
    %210 = vmatprep.subr.mxu0 0.0
    %211 = vmatpush1.msra.mxu0 0.0
    %212 = vmatprep.subr.mxu0 0.0
    %213 = vmatpush1.msra.mxu0 0.0
    %214 = vmatprep.subr.mxu0 0.0
    %215 = vmatpush1.msra.mxu0 0.0
    %216 = vmatprep.subr.mxu0 0.0
    %217 = vmatpush1.msra.mxu0 0.0
    %218 = vmatprep.subr.mxu0 0.0
    %219 = vmatpush1.msra.mxu0 0.0
    %220 = vmatprep.subr.mxu0 0.0
    %221 = vmatpush1.msra.mxu0 0.0
    %222 = vmatprep.subr.mxu0 0.0
    %223 = vmatpush1.msra.mxu0 0.0
    %224 = vmatprep.subr.mxu0 0.0
    %225 = vmatpush1.msra.mxu0 0.0
    %226 = vmatprep.subr.mxu0 0.0
    %227 = vmatpush1.msra.mxu0 0.0
    %228 = vmatprep.subr.mxu0 0.0
    %229 = vmatpush1.msra.mxu0 0.0
    %230 = vmatprep.subr.mxu0 0.0
    %231 = vmatpush1.msra.mxu0 0.0
    %232 = vmatprep.subr.mxu0 0.0
    %233 = vmatpush1.msra.mxu0 0.0
    %234 = vmatprep.subr.mxu0 0.0
    %235 = vmatpush1.msra.mxu0 0.0
    %236 = vmatprep.subr.mxu0 0.0
    %237 = vmatpush1.msra.mxu0 0.0
    %238 = vmatprep.subr.mxu0 0.0
    %239 = vmatpush1.msra.mxu0 0.0
    %240 = vmatprep.subr.mxu0 0.0
    %241 = vmatpush1.msra.mxu0 0.0
    %242 = vmatprep.subr.mxu0 0.0
    %243 = vmatpush1.msra.mxu0 0.0
    %244 = vmatprep.subr.mxu0 0.0
    %245 = vmatpush1.msra.mxu0 0.0
    %246 = vmatprep.mubr.f32.mxu0 0.0
    %247 = vmatmul.mubr.f32.gmra.mrb[0].mxu0 %v180
    %v248 = vpop.f32.mrb[0].mxu0
    %v249 = vadd.f32 %v176, %v248
    %v250 = vpop.f32.mrb[0].mxu0
    %251 = vdwg.mxu0
    %v252 = vmax.f32 %v249, 0.0
    %v253 = vld [vmem:[#allocation8] sm:$0xff]
    %v254 = vld [vmem:[#allocation8 + $0x8] sm:$0xff]
    %v255 = vld [vmem:[#allocation8 + $0x10] sm:$0xff]
    %v256 = vld [vmem:[#allocation8 + $0x18] sm:$0xff]
    %v257 = vld [vmem:[%s6] sm:$0x1]
    %v259 = vlaneseq
    %v260 = vshrl.u32 %v259, 7
    %v261 = vsub.s32 0, %v260
    %v262 = vrot.slane %v257, %v261
    %v265 = vsel %vm178, %v252, 0
    %267 = vmatprep.subr.mxu0 0.0
    %268 = vmatpush1.msra.mxu0 %v253
    %269 = vmatprep.subr.mxu0 0.0
    %270 = vmatpush1.msra.mxu0 %v254
    %271 = vmatprep.subr.mxu0 0.0
    %272 = vmatpush1.msra.mxu0 %v255
    %273 = vmatprep.subr.mxu0 0.0
    %274 = vmatpush1.msra.mxu0 %v256
    %275 = vmatprep.subr.mxu0 0.0
    %276 = vmatpush1.msra.mxu0 0.0
    %277 = vmatprep.subr.mxu0 0.0
    %278 = vmatpush1.msra.mxu0 0.0
    %279 = vmatprep.subr.mxu0 0.0
    %280 = vmatpush1.msra.mxu0 0.0
    %281 = vmatprep.subr.mxu0 0.0
    %282 = vmatpush1.msra.mxu0 0.0
    %283 = vmatprep.subr.mxu0 0.0
    %284 = vmatpush1.msra.mxu0 0.0
    %285 = vmatprep.subr.mxu0 0.0
    %286 = vmatpush1.msra.mxu0 0.0
    %287 = vmatprep.subr.mxu0 0.0
    %288 = vmatpush1.msra.mxu0 0.0
    %289 = vmatprep.subr.mxu0 0.0
    %290 = vmatpush1.msra.mxu0 0.0
    %291 = vmatprep.subr.mxu0 0.0
    %292 = vmatpush1.msra.mxu0 0.0
    %293 = vmatprep.subr.mxu0 0.0
    %294 = vmatpush1.msra.mxu0 0.0
    %295 = vmatprep.subr.mxu0 0.0
    %296 = vmatpush1.msra.mxu0 0.0
    %297 = vmatprep.subr.mxu0 0.0
    %298 = vmatpush1.msra.mxu0 0.0
    %299 = vmatprep.subr.mxu0 0.0
    %300 = vmatpush1.msra.mxu0 0.0
    %301 = vmatprep.subr.mxu0 0.0
    %302 = vmatpush1.msra.mxu0 0.0
    %303 = vmatprep.subr.mxu0 0.0
    %304 = vmatpush1.msra.mxu0 0.0
    %305 = vmatprep.subr.mxu0 0.0
    %306 = vmatpush1.msra.mxu0 0.0
    %307 = vmatprep.subr.mxu0 0.0
    %308 = vmatpush1.msra.mxu0 0.0
    %309 = vmatprep.subr.mxu0 0.0
    %310 = vmatpush1.msra.mxu0 0.0
    %311 = vmatprep.subr.mxu0 0.0
    %312 = vmatpush1.msra.mxu0 0.0
    %313 = vmatprep.subr.mxu0 0.0
    %314 = vmatpush1.msra.mxu0 0.0
    %315 = vmatprep.subr.mxu0 0.0
    %316 = vmatpush1.msra.mxu0 0.0
    %317 = vmatprep.subr.mxu0 0.0
    %318 = vmatpush1.msra.mxu0 0.0
    %319 = vmatprep.subr.mxu0 0.0
    %320 = vmatpush1.msra.mxu0 0.0
    %321 = vmatprep.subr.mxu0 0.0
    %322 = vmatpush1.msra.mxu0 0.0
    %323 = vmatprep.subr.mxu0 0.0
    %324 = vmatpush1.msra.mxu0 0.0
    %325 = vmatprep.subr.mxu0 0.0
    %326 = vmatpush1.msra.mxu0 0.0
    %327 = vmatprep.subr.mxu0 0.0
    %328 = vmatpush1.msra.mxu0 0.0
    %329 = vmatprep.subr.mxu0 0.0
    %330 = vmatpush1.msra.mxu0 0.0
    %331 = vmatprep.mubr.f32.mxu0 0.0
    %332 = vmatmul.mubr.f32.gmra.mrb[0].mxu0 %v265
    %v333 = vpop.f32.mrb[0].mxu0
    %v334 = vadd.f32 %v262, %v333
    %v335 = vpop.f32.mrb[0].mxu0
    %336 = vdwg.mxu0
    %v337 = vtanh.pop %v334
    %v338 = vmul.f32 %v337, 1.442695
    %v339 = vpow.pop %v338
    %341 = vrot.lane.b32.xlu0 %v339, 16
    %v342 = vpop.permute.xlu0 %341
    %v344 = vmul.f32 %v82, %v342
    %v345 = vadd.f32 %v344, %v334
    %v346 = vsel %vm92, %v82, %v345
    %vm347 = vcmask 254976
    %348 = vst.msk [vmem:[#allocation10] sm:$0x3] %vm347, %v346
    %vm349 = vcmask 123904
    %v350 = vsel %vm349, %v337, 0.0
    %351 = vadd.xlane.f32.xlu0 %v350
    %v352 = vpop.xlane.xlu0 %351
    %vm353 = vcmask 1024
    %354 = vst.msk [vmem:[%s8] sm:$0x3] %vm353, %v352
    // Predicated region
    $region46: #{tpu_custom_call.1} parent=1 // pred_check
      _
    $region47: #{tpu_custom_call.1} parent=1 // pred_check_branch
      %356 = sbr.rel (0) target = $region49
    $region48: #{tpu_custom_call.1} parent=1 // pred_region
      %s358 = ssub.s32 32, 32
      %359 = vsyncadd [#allocation4], %s358
      %s361 = sshll.u32 [#allocation10], 4
      %s362 = int_to_ptr.vmem [resolvable:$true] %s361
      %364 = dma.vmem_to_hbm [thread:$0]  %s362, 32, %s7, [#allocation4]
    $region49: #{tpu_custom_call.1} parent=1 // pred_fallthru
      _
    // Predicated region
    $region50: #{tpu_custom_call.1} parent=1 // pred_check
      _
    $region51: #{tpu_custom_call.1} parent=1 // pred_check_branch
      %366 = sbr.rel (0) target = $region53
    $region52: #{tpu_custom_call.1} parent=1 // pred_region
      _
    $region53: #{tpu_custom_call.1} parent=1 // pred_fallthru
      _
    // Predicated region
    $region54: #{tpu_custom_call.1} parent=1 // pred_check
      _
    $region55: #{tpu_custom_call.1} parent=1 // pred_check_branch
      %368 = sbr.rel (0) target = $region57
    $region56: #{tpu_custom_call.1} parent=1 // pred_region
      %369 = dma.done [#allocation4], 32
    $region57: #{tpu_custom_call.1} parent=1 // pred_fallthru
      _
    // Predicated region
    $region58: #{tpu_custom_call.1} parent=1 // pred_check
      _
    $region59: #{tpu_custom_call.1} parent=1 // pred_check_branch
      %371 = sbr.rel (0) target = $region61
    $region60: #{tpu_custom_call.1} parent=1 // pred_region
      _
    $region61: #{tpu_custom_call.1} parent=1 // pred_fallthru
      _
    %372 = vsyncpa [#allocation3], 1
    %373 = vsyncpa [#allocation6], 1
    %374 = vsyncpa [#allocation9], 1
    %375 = vsyncpa [#allocation4], 1

</llo_original>
